<compile_context>
chip_gen: v6e
topology: v6e:2x2x1
jax: 0.10.0
libtpu: 0.0.40
codegen_flags: <defaults>
</compile_context>

<pallas_src>
import numpy as np
import jax
import jax.numpy as jnp
from jax import lax
from jax.experimental import pallas as pl
from jax.experimental.pallas import tpu as pltpu


# -----------------------------------------------------------------------------
# Pallas kernel: fused bidirectional vanilla tanh-RNN.
# -----------------------------------------------------------------------------
def birnn_kernel(x_ref,        # [T*B, Din] f32 (time-major flattened)
                 wih_ref,      # [Din, 2H]  bf16  (= [Wih_f | Wih_b])
                 whh_ref,      # [2H, 2H]   bf16  (= blockdiag(Whh_f, Whh_b))
                 b_ref,        # [1, 2H]    f32   (= [b_f | b_b])
                 out_ref,      # [T, B, 2H] f32   (fwd | bwd, time-aligned)
                 u_sc,         # VMEM [T, B, 2H] f32  fused-layout input proj
                 work_sc,      # VMEM [T, B, 2H] f32  per-step fused hidden
                 h_sc):        # VMEM [B, 2H]    f32  carried hidden state
    T, B, H2 = out_ref.shape
    H = H2 // 2

    # ---- 1) hoisted input projections for BOTH directions: one MXU matmul.
    x_bf16 = x_ref[...].astype(jnp.bfloat16)
    proj = (jnp.dot(x_bf16, wih_ref[...], preferred_element_type=jnp.float32)
            + b_ref[...])                                  # [T*B, 2H] f32

    # ---- 2) reshuffle into fused-recurrence layout (off the serial path):
    #   u_sc[i, :, :H] = x[i]     @ Wih_f + b_f   (fwd input at time i)
    #   u_sc[i, :, H:] = x[T-1-i] @ Wih_b + b_b   (bwd input at time T-1-i)
    for i in range(T):                                     # static, tiny
        j = T - 1 - i
        u_sc[i] = jnp.concatenate(
            [proj[i * B:(i + 1) * B, :H],
             proj[j * B:(j + 1) * B, H:]], axis=-1)

    # ---- 3) fused recurrence: ONE matmul + ONE tanh per step, f32 carry.
    h_sc[...] = jnp.zeros_like(h_sc)
    whh = whh_ref[...]                                     # bf16 [2H, 2H]

    def step(i, carry):
        h_new = jnp.tanh(
            jnp.dot(h_sc[...].astype(jnp.bfloat16), whh,
                    preferred_element_type=jnp.float32)
            + u_sc[i])
        h_sc[...] = h_new                                  # carried state (f32)
        work_sc[i] = h_new                                 # sequential store
        return carry

    lax.fori_loop(0, T, step, 0, unroll=True)

    # ---- 4) finalize: one combined lane-dense store per time step.
    #   out[t, :, :H] = hf(t) = work[t, :, :H]
    #   out[t, :, H:] = hb(t) = work[T-1-t, :, H:]
    for t in range(T):                                     # static, tiny
        out_ref[t] = jnp.concatenate(
            [work_sc[t, :, :H], work_sc[T - 1 - t, :, H:]], axis=-1)


def birnn_pallas(x_flat, wih_cat, whh_blk, b_cat, T, B):
    """x_flat: [T*B, Din] f32 (time-major) -> [T, B, 2H] f32 (fwd|bwd)."""
    H2 = whh_blk.shape[0]
    vmem = pl.BlockSpec(memory_space=pltpu.MemorySpace.VMEM)
    return pl.pallas_call(
        birnn_kernel,
        out_shape=jax.ShapeDtypeStruct((T, B, H2), jnp.float32),
        in_specs=[vmem, vmem, vmem, vmem],
        out_specs=vmem,
        scratch_shapes=[pltpu.VMEM((T, B, H2), jnp.float32),
                        pltpu.VMEM((T, B, H2), jnp.float32),
                        pltpu.VMEM((B, H2), jnp.float32)],
    )(x_flat, wih_cat, whh_blk, b_cat)


# -----------------------------------------------------------------------------
# NER.forward (dense part + bounded masked_select), single module-level jit.
# -----------------------------------------------------------------------------
def ner_forward_dense(w_in, c_in, params):
    """Embeds, concat, (eval) dropout, BiRNN -> [B, T, 2H]."""
    w_emb = params["word_embed"][w_in]                     # [B, T, w_dim]
    c_emb = params["char_embed"][c_in]                     # [B, T, c_dim]
    emb = jnp.concatenate([w_emb, c_emb], axis=2)          # [B, T, Din]
    # TODO(synk): nn.Dropout is identity in eval mode; training-mode mask/scale
    # not implemented here.
    B, T, Din = emb.shape
    H = params["whh_f"].shape[0]

    # Weight packing for the fused kernel (constant-folded inside jit).
    wih_cat = jnp.concatenate([params["wih_f"], params["wih_b"]],
                              axis=1).astype(jnp.bfloat16)           # [Din,2H]
    z = jnp.zeros((H, H), jnp.float32)
    whh_blk = jnp.concatenate(
        [jnp.concatenate([params["whh_f"], z], axis=1),
         jnp.concatenate([z, params["whh_b"]], axis=1)],
        axis=0).astype(jnp.bfloat16)                                  # [2H,2H]
    b_cat = jnp.concatenate([params["b_f"], params["b_b"]], axis=1)   # [1,2H]

    x_flat = jnp.transpose(emb, (1, 0, 2)).reshape(T * B, Din)        # time-major
    out_tbd = birnn_pallas(x_flat, wih_cat, whh_blk, b_cat, T, B)     # [T,B,2H]
    return jnp.transpose(out_tbd, (1, 0, 2))                          # [B,T,2H]


@jax.jit
def ner_forward(w_in, c_in, char_mask, params):
    """Full NER.forward semantics.

    masked_select has a data-dependent output shape, so we return a bounded
    on-device stable partition: valid rows first (original order), padded to
    B*T rows, plus the valid-row count and the dense output.
    """
    out = ner_forward_dense(w_in, c_in, params)            # [B, T, 2H]
    B, T, D = out.shape
    flat = out.reshape(B * T, D)
    m = char_mask.reshape(B * T)
    idx = jnp.arange(B * T, dtype=jnp.int32)
    key = jnp.where(m, idx, idx + B * T)                   # valid rows sort first
    order = jnp.argsort(key)
    selected_padded = flat[order]                          # [B*T, 2H]
    n_sel = jnp.sum(m.astype(jnp.int32))
    return selected_padded, n_sel, out


# -----------------------------------------------------------------------------
# Deterministic parameter init
# -----------------------------------------------------------------------------
def init_params(key, w_num, w_dim, c_num, c_dim, hidden):
    ks = jax.random.split(key, 10)
    din = w_dim + c_dim
    s_in = 1.0 / np.sqrt(din)
    s_h = 1.0 / np.sqrt(hidden)
    return {
        "word_embed": jax.random.normal(ks[0], (w_num, w_dim), jnp.float32) * 0.1,
        "char_embed": jax.random.normal(ks[1], (c_num, c_dim), jnp.float32) * 0.1,
        # weights stored pre-transposed: x @ W_ih, h @ W_hh
        "wih_f": jax.random.uniform(ks[2], (din, hidden), jnp.float32, -s_in, s_in),
        "whh_f": jax.random.uniform(ks[3], (hidden, hidden), jnp.float32, -s_h, s_h),
        "b_f": jax.random.uniform(ks[4], (1, hidden), jnp.float32, -s_h, s_h),
        "wih_b": jax.random.uniform(ks[5], (din, hidden), jnp.float32, -s_in, s_in),
        "whh_b": jax.random.uniform(ks[6], (hidden, hidden), jnp.float32, -s_h, s_h),
        "b_b": jax.random.uniform(ks[7], (1, hidden), jnp.float32, -s_h, s_h),
    }


# -----------------------------------------------------------------------------
# NumPy reference (f32, for correctness check)
# -----------------------------------------------------------------------------
def reference_dense(w_in, c_in, p):
    w_emb = np.asarray(p["word_embed"])[np.asarray(w_in)]
    c_emb = np.asarray(p["char_embed"])[np.asarray(c_in)]
    emb = np.concatenate([w_emb, c_emb], axis=2).astype(np.float32)
    B, T, _ = emb.shape
    H = np.asarray(p["whh_f"]).shape[0]
    outf = np.zeros((B, T, H), np.float32)
    outb = np.zeros((B, T, H), np.float32)
    hf = np.zeros((B, H), np.float32)
    hb = np.zeros((B, H), np.float32)
    for t in range(T):
        hf = np.tanh(emb[:, t] @ np.asarray(p["wih_f"])
                     + hf @ np.asarray(p["whh_f"]) + np.asarray(p["b_f"]))
        outf[:, t] = hf
        tb = T - 1 - t
        hb = np.tanh(emb[:, tb] @ np.asarray(p["wih_b"])
                     + hb @ np.asarray(p["whh_b"]) + np.asarray(p["b_b"]))
        outb[:, tb] = hb
    return np.concatenate([outf, outb], axis=2)


# -----------------------------------------------------------------------------
if __name__ == "__main__":
    B, T = 2, 8
    w_num, w_dim = 50, 16
    c_num, c_dim = 30, 16
    hidden = 16                       # one_direction_dim; rnn_outdim = 32

    root = jax.random.PRNGKey(0)
    k_par, k_w, k_c, k_m = jax.random.split(root, 4)

    params = init_params(k_par, w_num, w_dim, c_num, c_dim, hidden)
    w_in = jax.random.randint(k_w, (B, T), 0, w_num, dtype=jnp.int32)
    c_in = jax.random.randint(k_c, (B, T), 0, c_num, dtype=jnp.int32)
    char_mask = jax.random.bernoulli(k_m, 0.6, (B, T))

    selected_padded, n_sel, dense_out = ner_forward(w_in, c_in, char_mask, params)
    jax.block_until_ready((selected_padded, n_sel, dense_out))

    # correctness check against f32 NumPy reference (bf16 MXU operands -> loose tol)
    ref = reference_dense(w_in, c_in, params)
    np.testing.assert_allclose(np.asarray(dense_out), ref, rtol=2e-2, atol=2e-2)

    n = int(n_sel)
    mask_np = np.asarray(char_mask).reshape(-1).astype(bool)
    assert n == int(mask_np.sum())
    ref_sel = ref.reshape(B * T, 2 * hidden)[mask_np]
    np.testing.assert_allclose(np.asarray(selected_padded)[:n], ref_sel,
                               rtol=2e-2, atol=2e-2)
    assert selected_padded.shape == (B * T, 2 * hidden)

    print("KERNEL_OK")
</pallas_src>

<mosaic_0001>
module attributes {stable_mosaic.version = 11 : i64} {
  func.func @birnn_kernel(%arg0: memref<16x32xf32, #tpu.memory_space<vmem>>, %arg1: memref<32x32xbf16, #tpu.memory_space<vmem>>, %arg2: memref<32x32xbf16, #tpu.memory_space<vmem>>, %arg3: memref<1x32xf32, #tpu.memory_space<vmem>>, %arg4: memref<8x2x32xf32, #tpu.memory_space<vmem>>, %arg5: memref<8x2x32xf32, #tpu.memory_space<vmem>>, %arg6: memref<8x2x32xf32, #tpu.memory_space<vmem>>, %arg7: memref<2x32xf32, #tpu.memory_space<vmem>>) attributes {dimension_semantics = [], scalar_prefetch = 0 : i64, scratch_operands = 3 : i64, tpu.core_type = #tpu.core_type<tc>} {
    %c0 = arith.constant 0 : index
    %c0_0 = arith.constant 0 : index
    %0 = vector.load %arg0[%c0, %c0_0] : memref<16x32xf32, #tpu.memory_space<vmem>>, vector<16x32xf32>
    %1 = arith.truncf %0 : vector<16x32xf32> to vector<16x32xbf16>
    %c0_1 = arith.constant 0 : index
    %c0_2 = arith.constant 0 : index
    %2 = vector.load %arg1[%c0_1, %c0_2] : memref<32x32xbf16, #tpu.memory_space<vmem>>, vector<32x32xbf16>
    %cst = arith.constant dense<0.000000e+00> : vector<16x32xf32>
    %3 = tpu.matmul %1, %2, %cst {dimension_numbers = #tpu.dot_dimension_numbers<[1], [0], [0], [1], [0, 0, 1, 1], [], []>} : vector<16x32xbf16>, vector<32x32xbf16>, vector<16x32xf32> -> vector<16x32xf32>
    %c0_3 = arith.constant 0 : index
    %c0_4 = arith.constant 0 : index
    %4 = vector.load %arg3[%c0_3, %c0_4] : memref<1x32xf32, #tpu.memory_space<vmem>>, vector<1x32xf32>
    %5 = vector.broadcast %4 : vector<1x32xf32> to vector<16x32xf32>
    %6 = arith.addf %3, %5 : vector<16x32xf32>
    %7 = vector.extract_strided_slice %6 {offsets = [0, 0], sizes = [2, 16], strides = [1, 1]} : vector<16x32xf32> to vector<2x16xf32>
    %8 = vector.extract_strided_slice %6 {offsets = [14, 16], sizes = [2, 16], strides = [1, 1]} : vector<16x32xf32> to vector<2x16xf32>
    %9 = tpu.concatenate %7, %8 in 1 : vector<2x16xf32>, vector<2x16xf32> -> vector<2x32xf32>
    %c0_5 = arith.constant 0 : index
    %c0_6 = arith.constant 0 : index
    %c0_7 = arith.constant 0 : index
    %10 = vector.load %arg5[%c0_5, %c0_6, %c0_7] : memref<8x2x32xf32, #tpu.memory_space<vmem>>, vector<1x2x32xf32>
    %11 = vector.shape_cast %10 : vector<1x2x32xf32> to vector<2x32xf32>
    %12 = vector.shape_cast %9 : vector<2x32xf32> to vector<1x2x32xf32>
    tpu.vector_store %arg5[%c0_5, %c0_6, %c0_7], %12 {strides = array<i32>} : memref<8x2x32xf32, #tpu.memory_space<vmem>>, vector<1x2x32xf32>,
    %13 = vector.extract_strided_slice %6 {offsets = [2, 0], sizes = [2, 16], strides = [1, 1]} : vector<16x32xf32> to vector<2x16xf32>
    %14 = vector.extract_strided_slice %6 {offsets = [12, 16], sizes = [2, 16], strides = [1, 1]} : vector<16x32xf32> to vector<2x16xf32>
    %15 = tpu.concatenate %13, %14 in 1 : vector<2x16xf32>, vector<2x16xf32> -> vector<2x32xf32>
    %c1 = arith.constant 1 : index
    %c0_8 = arith.constant 0 : index
    %c0_9 = arith.constant 0 : index
    %16 = vector.load %arg5[%c1, %c0_8, %c0_9] : memref<8x2x32xf32, #tpu.memory_space<vmem>>, vector<1x2x32xf32>
    %17 = vector.shape_cast %16 : vector<1x2x32xf32> to vector<2x32xf32>
    %18 = vector.shape_cast %15 : vector<2x32xf32> to vector<1x2x32xf32>
    tpu.vector_store %arg5[%c1, %c0_8, %c0_9], %18 {strides = array<i32>} : memref<8x2x32xf32, #tpu.memory_space<vmem>>, vector<1x2x32xf32>,
    %19 = vector.extract_strided_slice %6 {offsets = [4, 0], sizes = [2, 16], strides = [1, 1]} : vector<16x32xf32> to vector<2x16xf32>
    %20 = vector.extract_strided_slice %6 {offsets = [10, 16], sizes = [2, 16], strides = [1, 1]} : vector<16x32xf32> to vector<2x16xf32>
    %21 = tpu.concatenate %19, %20 in 1 : vector<2x16xf32>, vector<2x16xf32> -> vector<2x32xf32>
    %c2 = arith.constant 2 : index
    %c0_10 = arith.constant 0 : index
    %c0_11 = arith.constant 0 : index
    %22 = vector.load %arg5[%c2, %c0_10, %c0_11] : memref<8x2x32xf32, #tpu.memory_space<vmem>>, vector<1x2x32xf32>
    %23 = vector.shape_cast %22 : vector<1x2x32xf32> to vector<2x32xf32>
    %24 = vector.shape_cast %21 : vector<2x32xf32> to vector<1x2x32xf32>
    tpu.vector_store %arg5[%c2, %c0_10, %c0_11], %24 {strides = array<i32>} : memref<8x2x32xf32, #tpu.memory_space<vmem>>, vector<1x2x32xf32>,
    %25 = vector.extract_strided_slice %6 {offsets = [6, 0], sizes = [2, 16], strides = [1, 1]} : vector<16x32xf32> to vector<2x16xf32>
    %26 = vector.extract_strided_slice %6 {offsets = [8, 16], sizes = [2, 16], strides = [1, 1]} : vector<16x32xf32> to vector<2x16xf32>
    %27 = tpu.concatenate %25, %26 in 1 : vector<2x16xf32>, vector<2x16xf32> -> vector<2x32xf32>
    %c3 = arith.constant 3 : index
    %c0_12 = arith.constant 0 : index
    %c0_13 = arith.constant 0 : index
    %28 = vector.load %arg5[%c3, %c0_12, %c0_13] : memref<8x2x32xf32, #tpu.memory_space<vmem>>, vector<1x2x32xf32>
    %29 = vector.shape_cast %28 : vector<1x2x32xf32> to vector<2x32xf32>
    %30 = vector.shape_cast %27 : vector<2x32xf32> to vector<1x2x32xf32>
    tpu.vector_store %arg5[%c3, %c0_12, %c0_13], %30 {strides = array<i32>} : memref<8x2x32xf32, #tpu.memory_space<vmem>>, vector<1x2x32xf32>,
    %31 = vector.extract_strided_slice %6 {offsets = [8, 0], sizes = [2, 16], strides = [1, 1]} : vector<16x32xf32> to vector<2x16xf32>
    %32 = vector.extract_strided_slice %6 {offsets = [6, 16], sizes = [2, 16], strides = [1, 1]} : vector<16x32xf32> to vector<2x16xf32>
    %33 = tpu.concatenate %31, %32 in 1 : vector<2x16xf32>, vector<2x16xf32> -> vector<2x32xf32>
    %c4 = arith.constant 4 : index
    %c0_14 = arith.constant 0 : index
    %c0_15 = arith.constant 0 : index
    %34 = vector.load %arg5[%c4, %c0_14, %c0_15] : memref<8x2x32xf32, #tpu.memory_space<vmem>>, vector<1x2x32xf32>
    %35 = vector.shape_cast %34 : vector<1x2x32xf32> to vector<2x32xf32>
    %36 = vector.shape_cast %33 : vector<2x32xf32> to vector<1x2x32xf32>
    tpu.vector_store %arg5[%c4, %c0_14, %c0_15], %36 {strides = array<i32>} : memref<8x2x32xf32, #tpu.memory_space<vmem>>, vector<1x2x32xf32>,
    %37 = vector.extract_strided_slice %6 {offsets = [10, 0], sizes = [2, 16], strides = [1, 1]} : vector<16x32xf32> to vector<2x16xf32>
    %38 = vector.extract_strided_slice %6 {offsets = [4, 16], sizes = [2, 16], strides = [1, 1]} : vector<16x32xf32> to vector<2x16xf32>
    %39 = tpu.concatenate %37, %38 in 1 : vector<2x16xf32>, vector<2x16xf32> -> vector<2x32xf32>
    %c5 = arith.constant 5 : index
    %c0_16 = arith.constant 0 : index
    %c0_17 = arith.constant 0 : index
    %40 = vector.load %arg5[%c5, %c0_16, %c0_17] : memref<8x2x32xf32, #tpu.memory_space<vmem>>, vector<1x2x32xf32>
    %41 = vector.shape_cast %40 : vector<1x2x32xf32> to vector<2x32xf32>
    %42 = vector.shape_cast %39 : vector<2x32xf32> to vector<1x2x32xf32>
    tpu.vector_store %arg5[%c5, %c0_16, %c0_17], %42 {strides = array<i32>} : memref<8x2x32xf32, #tpu.memory_space<vmem>>, vector<1x2x32xf32>,
    %43 = vector.extract_strided_slice %6 {offsets = [12, 0], sizes = [2, 16], strides = [1, 1]} : vector<16x32xf32> to vector<2x16xf32>
    %44 = vector.extract_strided_slice %6 {offsets = [2, 16], sizes = [2, 16], strides = [1, 1]} : vector<16x32xf32> to vector<2x16xf32>
    %45 = tpu.concatenate %43, %44 in 1 : vector<2x16xf32>, vector<2x16xf32> -> vector<2x32xf32>
    %c6 = arith.constant 6 : index
    %c0_18 = arith.constant 0 : index
    %c0_19 = arith.constant 0 : index
    %46 = vector.load %arg5[%c6, %c0_18, %c0_19] : memref<8x2x32xf32, #tpu.memory_space<vmem>>, vector<1x2x32xf32>
    %47 = vector.shape_cast %46 : vector<1x2x32xf32> to vector<2x32xf32>
    %48 = vector.shape_cast %45 : vector<2x32xf32> to vector<1x2x32xf32>
    tpu.vector_store %arg5[%c6, %c0_18, %c0_19], %48 {strides = array<i32>} : memref<8x2x32xf32, #tpu.memory_space<vmem>>, vector<1x2x32xf32>,
    %49 = vector.extract_strided_slice %6 {offsets = [14, 0], sizes = [2, 16], strides = [1, 1]} : vector<16x32xf32> to vector<2x16xf32>
    %50 = vector.extract_strided_slice %6 {offsets = [0, 16], sizes = [2, 16], strides = [1, 1]} : vector<16x32xf32> to vector<2x16xf32>
    %51 = tpu.concatenate %49, %50 in 1 : vector<2x16xf32>, vector<2x16xf32> -> vector<2x32xf32>
    %c7 = arith.constant 7 : index
    %c0_20 = arith.constant 0 : index
    %c0_21 = arith.constant 0 : index
    %52 = vector.load %arg5[%c7, %c0_20, %c0_21] : memref<8x2x32xf32, #tpu.memory_space<vmem>>, vector<1x2x32xf32>
    %53 = vector.shape_cast %52 : vector<1x2x32xf32> to vector<2x32xf32>
    %54 = vector.shape_cast %51 : vector<2x32xf32> to vector<1x2x32xf32>
    tpu.vector_store %arg5[%c7, %c0_20, %c0_21], %54 {strides = array<i32>} : memref<8x2x32xf32, #tpu.memory_space<vmem>>, vector<1x2x32xf32>,
    %cst_22 = arith.constant 0.000000e+00 : f32
    %55 = vector.broadcast %cst_22 : f32 to vector<2x32xf32>
    %c0_23 = arith.constant 0 : index
    %c0_24 = arith.constant 0 : index
    %56 = vector.load %arg7[%c0_23, %c0_24] : memref<2x32xf32, #tpu.memory_space<vmem>>, vector<2x32xf32>
    tpu.vector_store %arg7[%c0_23, %c0_24], %55 {strides = array<i32>} : memref<2x32xf32, #tpu.memory_space<vmem>>, vector<2x32xf32>,
    %c0_25 = arith.constant 0 : index
    %c0_26 = arith.constant 0 : index
    %57 = vector.load %arg2[%c0_25, %c0_26] : memref<32x32xbf16, #tpu.memory_space<vmem>>, vector<32x32xbf16>
    %c0_i32 = arith.constant 0 : i32
    %c0_27 = arith.constant 0 : index
    %c0_28 = arith.constant 0 : index
    %58 = vector.load %arg7[%c0_27, %c0_28] : memref<2x32xf32, #tpu.memory_space<vmem>>, vector<2x32xf32>
    %59 = arith.truncf %58 : vector<2x32xf32> to vector<2x32xbf16>
    %cst_29 = arith.constant dense<0.000000e+00> : vector<2x32xf32>
    %60 = tpu.matmul %59, %57, %cst_29 {dimension_numbers = #tpu.dot_dimension_numbers<[1], [0], [0], [1], [0, 0, 1, 1], [], []>} : vector<2x32xbf16>, vector<32x32xbf16>, vector<2x32xf32> -> vector<2x32xf32>
    %61 = arith.index_cast %c0_i32 : i32 to index
    %c0_30 = arith.constant 0 : index
    %c0_31 = arith.constant 0 : index
    %62 = vector.load %arg5[%61, %c0_30, %c0_31] : memref<8x2x32xf32, #tpu.memory_space<vmem>>, vector<1x2x32xf32>
    %63 = vector.shape_cast %62 : vector<1x2x32xf32> to vector<2x32xf32>
    %64 = arith.addf %60, %63 : vector<2x32xf32>
    %65 = math.tanh %64 : vector<2x32xf32>
    %c0_32 = arith.constant 0 : index
    %c0_33 = arith.constant 0 : index
    %66 = vector.load %arg7[%c0_32, %c0_33] : memref<2x32xf32, #tpu.memory_space<vmem>>, vector<2x32xf32>
    tpu.vector_store %arg7[%c0_32, %c0_33], %65 {strides = array<i32>} : memref<2x32xf32, #tpu.memory_space<vmem>>, vector<2x32xf32>,
    %67 = arith.index_cast %c0_i32 : i32 to index
    %c0_34 = arith.constant 0 : index
    %c0_35 = arith.constant 0 : index
    %68 = vector.load %arg6[%67, %c0_34, %c0_35] : memref<8x2x32xf32, #tpu.memory_space<vmem>>, vector<1x2x32xf32>
    %69 = vector.shape_cast %68 : vector<1x2x32xf32> to vector<2x32xf32>
    %70 = vector.shape_cast %65 : vector<2x32xf32> to vector<1x2x32xf32>
    tpu.vector_store %arg6[%67, %c0_34, %c0_35], %70 {strides = array<i32>} : memref<8x2x32xf32, #tpu.memory_space<vmem>>, vector<1x2x32xf32>,
    %c1_i32 = arith.constant 1 : i32
    %c0_36 = arith.constant 0 : index
    %c0_37 = arith.constant 0 : index
    %71 = vector.load %arg7[%c0_36, %c0_37] : memref<2x32xf32, #tpu.memory_space<vmem>>, vector<2x32xf32>
    %72 = arith.truncf %71 : vector<2x32xf32> to vector<2x32xbf16>
    %cst_38 = arith.constant dense<0.000000e+00> : vector<2x32xf32>
    %73 = tpu.matmul %72, %57, %cst_38 {dimension_numbers = #tpu.dot_dimension_numbers<[1], [0], [0], [1], [0, 0, 1, 1], [], []>} : vector<2x32xbf16>, vector<32x32xbf16>, vector<2x32xf32> -> vector<2x32xf32>
    %74 = arith.index_cast %c1_i32 : i32 to index
    %c0_39 = arith.constant 0 : index
    %c0_40 = arith.constant 0 : index
    %75 = vector.load %arg5[%74, %c0_39, %c0_40] : memref<8x2x32xf32, #tpu.memory_space<vmem>>, vector<1x2x32xf32>
    %76 = vector.shape_cast %75 : vector<1x2x32xf32> to vector<2x32xf32>
    %77 = arith.addf %73, %76 : vector<2x32xf32>
    %78 = math.tanh %77 : vector<2x32xf32>
    %c0_41 = arith.constant 0 : index
    %c0_42 = arith.constant 0 : index
    %79 = vector.load %arg7[%c0_41, %c0_42] : memref<2x32xf32, #tpu.memory_space<vmem>>, vector<2x32xf32>
    tpu.vector_store %arg7[%c0_41, %c0_42], %78 {strides = array<i32>} : memref<2x32xf32, #tpu.memory_space<vmem>>, vector<2x32xf32>,
    %80 = arith.index_cast %c1_i32 : i32 to index
    %c0_43 = arith.constant 0 : index
    %c0_44 = arith.constant 0 : index
    %81 = vector.load %arg6[%80, %c0_43, %c0_44] : memref<8x2x32xf32, #tpu.memory_space<vmem>>, vector<1x2x32xf32>
    %82 = vector.shape_cast %81 : vector<1x2x32xf32> to vector<2x32xf32>
    %83 = vector.shape_cast %78 : vector<2x32xf32> to vector<1x2x32xf32>
    tpu.vector_store %arg6[%80, %c0_43, %c0_44], %83 {strides = array<i32>} : memref<8x2x32xf32, #tpu.memory_space<vmem>>, vector<1x2x32xf32>,
    %c2_i32 = arith.constant 2 : i32
    %c0_45 = arith.constant 0 : index
    %c0_46 = arith.constant 0 : index
    %84 = vector.load %arg7[%c0_45, %c0_46] : memref<2x32xf32, #tpu.memory_space<vmem>>, vector<2x32xf32>
    %85 = arith.truncf %84 : vector<2x32xf32> to vector<2x32xbf16>
    %cst_47 = arith.constant dense<0.000000e+00> : vector<2x32xf32>
    %86 = tpu.matmul %85, %57, %cst_47 {dimension_numbers = #tpu.dot_dimension_numbers<[1], [0], [0], [1], [0, 0, 1, 1], [], []>} : vector<2x32xbf16>, vector<32x32xbf16>, vector<2x32xf32> -> vector<2x32xf32>
    %87 = arith.index_cast %c2_i32 : i32 to index
    %c0_48 = arith.constant 0 : index
    %c0_49 = arith.constant 0 : index
    %88 = vector.load %arg5[%87, %c0_48, %c0_49] : memref<8x2x32xf32, #tpu.memory_space<vmem>>, vector<1x2x32xf32>
    %89 = vector.shape_cast %88 : vector<1x2x32xf32> to vector<2x32xf32>
    %90 = arith.addf %86, %89 : vector<2x32xf32>
    %91 = math.tanh %90 : vector<2x32xf32>
    %c0_50 = arith.constant 0 : index
    %c0_51 = arith.constant 0 : index
    %92 = vector.load %arg7[%c0_50, %c0_51] : memref<2x32xf32, #tpu.memory_space<vmem>>, vector<2x32xf32>
    tpu.vector_store %arg7[%c0_50, %c0_51], %91 {strides = array<i32>} : memref<2x32xf32, #tpu.memory_space<vmem>>, vector<2x32xf32>,
    %93 = arith.index_cast %c2_i32 : i32 to index
    %c0_52 = arith.constant 0 : index
    %c0_53 = arith.constant 0 : index
    %94 = vector.load %arg6[%93, %c0_52, %c0_53] : memref<8x2x32xf32, #tpu.memory_space<vmem>>, vector<1x2x32xf32>
    %95 = vector.shape_cast %94 : vector<1x2x32xf32> to vector<2x32xf32>
    %96 = vector.shape_cast %91 : vector<2x32xf32> to vector<1x2x32xf32>
    tpu.vector_store %arg6[%93, %c0_52, %c0_53], %96 {strides = array<i32>} : memref<8x2x32xf32, #tpu.memory_space<vmem>>, vector<1x2x32xf32>,
    %c3_i32 = arith.constant 3 : i32
    %c0_54 = arith.constant 0 : index
    %c0_55 = arith.constant 0 : index
    %97 = vector.load %arg7[%c0_54, %c0_55] : memref<2x32xf32, #tpu.memory_space<vmem>>, vector<2x32xf32>
    %98 = arith.truncf %97 : vector<2x32xf32> to vector<2x32xbf16>
    %cst_56 = arith.constant dense<0.000000e+00> : vector<2x32xf32>
    %99 = tpu.matmul %98, %57, %cst_56 {dimension_numbers = #tpu.dot_dimension_numbers<[1], [0], [0], [1], [0, 0, 1, 1], [], []>} : vector<2x32xbf16>, vector<32x32xbf16>, vector<2x32xf32> -> vector<2x32xf32>
    %100 = arith.index_cast %c3_i32 : i32 to index
    %c0_57 = arith.constant 0 : index
    %c0_58 = arith.constant 0 : index
    %101 = vector.load %arg5[%100, %c0_57, %c0_58] : memref<8x2x32xf32, #tpu.memory_space<vmem>>, vector<1x2x32xf32>
    %102 = vector.shape_cast %101 : vector<1x2x32xf32> to vector<2x32xf32>
    %103 = arith.addf %99, %102 : vector<2x32xf32>
    %104 = math.tanh %103 : vector<2x32xf32>
    %c0_59 = arith.constant 0 : index
    %c0_60 = arith.constant 0 : index
    %105 = vector.load %arg7[%c0_59, %c0_60] : memref<2x32xf32, #tpu.memory_space<vmem>>, vector<2x32xf32>
    tpu.vector_store %arg7[%c0_59, %c0_60], %104 {strides = array<i32>} : memref<2x32xf32, #tpu.memory_space<vmem>>, vector<2x32xf32>,
    %106 = arith.index_cast %c3_i32 : i32 to index
    %c0_61 = arith.constant 0 : index
    %c0_62 = arith.constant 0 : index
    %107 = vector.load %arg6[%106, %c0_61, %c0_62] : memref<8x2x32xf32, #tpu.memory_space<vmem>>, vector<1x2x32xf32>
    %108 = vector.shape_cast %107 : vector<1x2x32xf32> to vector<2x32xf32>
    %109 = vector.shape_cast %104 : vector<2x32xf32> to vector<1x2x32xf32>
    tpu.vector_store %arg6[%106, %c0_61, %c0_62], %109 {strides = array<i32>} : memref<8x2x32xf32, #tpu.memory_space<vmem>>, vector<1x2x32xf32>,
    %c4_i32 = arith.constant 4 : i32
    %c0_63 = arith.constant 0 : index
    %c0_64 = arith.constant 0 : index
    %110 = vector.load %arg7[%c0_63, %c0_64] : memref<2x32xf32, #tpu.memory_space<vmem>>, vector<2x32xf32>
    %111 = arith.truncf %110 : vector<2x32xf32> to vector<2x32xbf16>
    %cst_65 = arith.constant dense<0.000000e+00> : vector<2x32xf32>
    %112 = tpu.matmul %111, %57, %cst_65 {dimension_numbers = #tpu.dot_dimension_numbers<[1], [0], [0], [1], [0, 0, 1, 1], [], []>} : vector<2x32xbf16>, vector<32x32xbf16>, vector<2x32xf32> -> vector<2x32xf32>
    %113 = arith.index_cast %c4_i32 : i32 to index
    %c0_66 = arith.constant 0 : index
    %c0_67 = arith.constant 0 : index
    %114 = vector.load %arg5[%113, %c0_66, %c0_67] : memref<8x2x32xf32, #tpu.memory_space<vmem>>, vector<1x2x32xf32>
    %115 = vector.shape_cast %114 : vector<1x2x32xf32> to vector<2x32xf32>
    %116 = arith.addf %112, %115 : vector<2x32xf32>
    %117 = math.tanh %116 : vector<2x32xf32>
    %c0_68 = arith.constant 0 : index
    %c0_69 = arith.constant 0 : index
    %118 = vector.load %arg7[%c0_68, %c0_69] : memref<2x32xf32, #tpu.memory_space<vmem>>, vector<2x32xf32>
    tpu.vector_store %arg7[%c0_68, %c0_69], %117 {strides = array<i32>} : memref<2x32xf32, #tpu.memory_space<vmem>>, vector<2x32xf32>,
    %119 = arith.index_cast %c4_i32 : i32 to index
    %c0_70 = arith.constant 0 : index
    %c0_71 = arith.constant 0 : index
    %120 = vector.load %arg6[%119, %c0_70, %c0_71] : memref<8x2x32xf32, #tpu.memory_space<vmem>>, vector<1x2x32xf32>
    %121 = vector.shape_cast %120 : vector<1x2x32xf32> to vector<2x32xf32>
    %122 = vector.shape_cast %117 : vector<2x32xf32> to vector<1x2x32xf32>
    tpu.vector_store %arg6[%119, %c0_70, %c0_71], %122 {strides = array<i32>} : memref<8x2x32xf32, #tpu.memory_space<vmem>>, vector<1x2x32xf32>,
    %c5_i32 = arith.constant 5 : i32
    %c0_72 = arith.constant 0 : index
    %c0_73 = arith.constant 0 : index
    %123 = vector.load %arg7[%c0_72, %c0_73] : memref<2x32xf32, #tpu.memory_space<vmem>>, vector<2x32xf32>
    %124 = arith.truncf %123 : vector<2x32xf32> to vector<2x32xbf16>
    %cst_74 = arith.constant dense<0.000000e+00> : vector<2x32xf32>
    %125 = tpu.matmul %124, %57, %cst_74 {dimension_numbers = #tpu.dot_dimension_numbers<[1], [0], [0], [1], [0, 0, 1, 1], [], []>} : vector<2x32xbf16>, vector<32x32xbf16>, vector<2x32xf32> -> vector<2x32xf32>
    %126 = arith.index_cast %c5_i32 : i32 to index
    %c0_75 = arith.constant 0 : index
    %c0_76 = arith.constant 0 : index
    %127 = vector.load %arg5[%126, %c0_75, %c0_76] : memref<8x2x32xf32, #tpu.memory_space<vmem>>, vector<1x2x32xf32>
    %128 = vector.shape_cast %127 : vector<1x2x32xf32> to vector<2x32xf32>
    %129 = arith.addf %125, %128 : vector<2x32xf32>
    %130 = math.tanh %129 : vector<2x32xf32>
    %c0_77 = arith.constant 0 : index
    %c0_78 = arith.constant 0 : index
    %131 = vector.load %arg7[%c0_77, %c0_78] : memref<2x32xf32, #tpu.memory_space<vmem>>, vector<2x32xf32>
    tpu.vector_store %arg7[%c0_77, %c0_78], %130 {strides = array<i32>} : memref<2x32xf32, #tpu.memory_space<vmem>>, vector<2x32xf32>,
    %132 = arith.index_cast %c5_i32 : i32 to index
    %c0_79 = arith.constant 0 : index
    %c0_80 = arith.constant 0 : index
    %133 = vector.load %arg6[%132, %c0_79, %c0_80] : memref<8x2x32xf32, #tpu.memory_space<vmem>>, vector<1x2x32xf32>
    %134 = vector.shape_cast %133 : vector<1x2x32xf32> to vector<2x32xf32>
    %135 = vector.shape_cast %130 : vector<2x32xf32> to vector<1x2x32xf32>
    tpu.vector_store %arg6[%132, %c0_79, %c0_80], %135 {strides = array<i32>} : memref<8x2x32xf32, #tpu.memory_space<vmem>>, vector<1x2x32xf32>,
    %c6_i32 = arith.constant 6 : i32
    %c0_81 = arith.constant 0 : index
    %c0_82 = arith.constant 0 : index
    %136 = vector.load %arg7[%c0_81, %c0_82] : memref<2x32xf32, #tpu.memory_space<vmem>>, vector<2x32xf32>
    %137 = arith.truncf %136 : vector<2x32xf32> to vector<2x32xbf16>
    %cst_83 = arith.constant dense<0.000000e+00> : vector<2x32xf32>
    %138 = tpu.matmul %137, %57, %cst_83 {dimension_numbers = #tpu.dot_dimension_numbers<[1], [0], [0], [1], [0, 0, 1, 1], [], []>} : vector<2x32xbf16>, vector<32x32xbf16>, vector<2x32xf32> -> vector<2x32xf32>
    %139 = arith.index_cast %c6_i32 : i32 to index
    %c0_84 = arith.constant 0 : index
    %c0_85 = arith.constant 0 : index
    %140 = vector.load %arg5[%139, %c0_84, %c0_85] : memref<8x2x32xf32, #tpu.memory_space<vmem>>, vector<1x2x32xf32>
    %141 = vector.shape_cast %140 : vector<1x2x32xf32> to vector<2x32xf32>
    %142 = arith.addf %138, %141 : vector<2x32xf32>
    %143 = math.tanh %142 : vector<2x32xf32>
    %c0_86 = arith.constant 0 : index
    %c0_87 = arith.constant 0 : index
    %144 = vector.load %arg7[%c0_86, %c0_87] : memref<2x32xf32, #tpu.memory_space<vmem>>, vector<2x32xf32>
    tpu.vector_store %arg7[%c0_86, %c0_87], %143 {strides = array<i32>} : memref<2x32xf32, #tpu.memory_space<vmem>>, vector<2x32xf32>,
    %145 = arith.index_cast %c6_i32 : i32 to index
    %c0_88 = arith.constant 0 : index
    %c0_89 = arith.constant 0 : index
    %146 = vector.load %arg6[%145, %c0_88, %c0_89] : memref<8x2x32xf32, #tpu.memory_space<vmem>>, vector<1x2x32xf32>
    %147 = vector.shape_cast %146 : vector<1x2x32xf32> to vector<2x32xf32>
    %148 = vector.shape_cast %143 : vector<2x32xf32> to vector<1x2x32xf32>
    tpu.vector_store %arg6[%145, %c0_88, %c0_89], %148 {strides = array<i32>} : memref<8x2x32xf32, #tpu.memory_space<vmem>>, vector<1x2x32xf32>,
    %c7_i32 = arith.constant 7 : i32
    %c0_90 = arith.constant 0 : index
    %c0_91 = arith.constant 0 : index
    %149 = vector.load %arg7[%c0_90, %c0_91] : memref<2x32xf32, #tpu.memory_space<vmem>>, vector<2x32xf32>
    %150 = arith.truncf %149 : vector<2x32xf32> to vector<2x32xbf16>
    %cst_92 = arith.constant dense<0.000000e+00> : vector<2x32xf32>
    %151 = tpu.matmul %150, %57, %cst_92 {dimension_numbers = #tpu.dot_dimension_numbers<[1], [0], [0], [1], [0, 0, 1, 1], [], []>} : vector<2x32xbf16>, vector<32x32xbf16>, vector<2x32xf32> -> vector<2x32xf32>
    %152 = arith.index_cast %c7_i32 : i32 to index
    %c0_93 = arith.constant 0 : index
    %c0_94 = arith.constant 0 : index
    %153 = vector.load %arg5[%152, %c0_93, %c0_94] : memref<8x2x32xf32, #tpu.memory_space<vmem>>, vector<1x2x32xf32>
    %154 = vector.shape_cast %153 : vector<1x2x32xf32> to vector<2x32xf32>
    %155 = arith.addf %151, %154 : vector<2x32xf32>
    %156 = math.tanh %155 : vector<2x32xf32>
    %c0_95 = arith.constant 0 : index
    %c0_96 = arith.constant 0 : index
    %157 = vector.load %arg7[%c0_95, %c0_96] : memref<2x32xf32, #tpu.memory_space<vmem>>, vector<2x32xf32>
    tpu.vector_store %arg7[%c0_95, %c0_96], %156 {strides = array<i32>} : memref<2x32xf32, #tpu.memory_space<vmem>>, vector<2x32xf32>,
    %158 = arith.index_cast %c7_i32 : i32 to index
    %c0_97 = arith.constant 0 : index
    %c0_98 = arith.constant 0 : index
    %159 = vector.load %arg6[%158, %c0_97, %c0_98] : memref<8x2x32xf32, #tpu.memory_space<vmem>>, vector<1x2x32xf32>
    %160 = vector.shape_cast %159 : vector<1x2x32xf32> to vector<2x32xf32>
    %161 = vector.shape_cast %156 : vector<2x32xf32> to vector<1x2x32xf32>
    tpu.vector_store %arg6[%158, %c0_97, %c0_98], %161 {strides = array<i32>} : memref<8x2x32xf32, #tpu.memory_space<vmem>>, vector<1x2x32xf32>,
    %c8_i32 = arith.constant 8 : i32
    %c0_99 = arith.constant 0 : index
    %c0_100 = arith.constant 0 : index
    %c0_101 = arith.constant 0 : index
    %162 = vector.load %arg6[%c0_99, %c0_100, %c0_101] : memref<8x2x32xf32, #tpu.memory_space<vmem>>, vector<1x2x16xf32>
    %163 = vector.shape_cast %162 : vector<1x2x16xf32> to vector<2x16xf32>
    %c7_102 = arith.constant 7 : index
    %c0_103 = arith.constant 0 : index
    %c16 = arith.constant 16 : index
    %164 = vector.load %arg6[%c7_102, %c0_103, %c16] : memref<8x2x32xf32, #tpu.memory_space<vmem>>, vector<1x2x16xf32>
    %165 = vector.shape_cast %164 : vector<1x2x16xf32> to vector<2x16xf32>
    %166 = tpu.concatenate %163, %165 in 1 : vector<2x16xf32>, vector<2x16xf32> -> vector<2x32xf32>
    %c0_104 = arith.constant 0 : index
    %c0_105 = arith.constant 0 : index
    %c0_106 = arith.constant 0 : index
    %167 = vector.load %arg4[%c0_104, %c0_105, %c0_106] : memref<8x2x32xf32, #tpu.memory_space<vmem>>, vector<1x2x32xf32>
    %168 = vector.shape_cast %167 : vector<1x2x32xf32> to vector<2x32xf32>
    %169 = vector.shape_cast %166 : vector<2x32xf32> to vector<1x2x32xf32>
    tpu.vector_store %arg4[%c0_104, %c0_105, %c0_106], %169 {strides = array<i32>} : memref<8x2x32xf32, #tpu.memory_space<vmem>>, vector<1x2x32xf32>,
    %c1_107 = arith.constant 1 : index
    %c0_108 = arith.constant 0 : index
    %c0_109 = arith.constant 0 : index
    %170 = vector.load %arg6[%c1_107, %c0_108, %c0_109] : memref<8x2x32xf32, #tpu.memory_space<vmem>>, vector<1x2x16xf32>
    %171 = vector.shape_cast %170 : vector<1x2x16xf32> to vector<2x16xf32>
    %c6_110 = arith.constant 6 : index
    %c0_111 = arith.constant 0 : index
    %c16_112 = arith.constant 16 : index
    %172 = vector.load %arg6[%c6_110, %c0_111, %c16_112] : memref<8x2x32xf32, #tpu.memory_space<vmem>>, vector<1x2x16xf32>
    %173 = vector.shape_cast %172 : vector<1x2x16xf32> to vector<2x16xf32>
    %174 = tpu.concatenate %171, %173 in 1 : vector<2x16xf32>, vector<2x16xf32> -> vector<2x32xf32>
    %c1_113 = arith.constant 1 : index
    %c0_114 = arith.constant 0 : index
    %c0_115 = arith.constant 0 : index
    %175 = vector.load %arg4[%c1_113, %c0_114, %c0_115] : memref<8x2x32xf32, #tpu.memory_space<vmem>>, vector<1x2x32xf32>
    %176 = vector.shape_cast %175 : vector<1x2x32xf32> to vector<2x32xf32>
    %177 = vector.shape_cast %174 : vector<2x32xf32> to vector<1x2x32xf32>
    tpu.vector_store %arg4[%c1_113, %c0_114, %c0_115], %177 {strides = array<i32>} : memref<8x2x32xf32, #tpu.memory_space<vmem>>, vector<1x2x32xf32>,
    %c2_116 = arith.constant 2 : index
    %c0_117 = arith.constant 0 : index
    %c0_118 = arith.constant 0 : index
    %178 = vector.load %arg6[%c2_116, %c0_117, %c0_118] : memref<8x2x32xf32, #tpu.memory_space<vmem>>, vector<1x2x16xf32>
    %179 = vector.shape_cast %178 : vector<1x2x16xf32> to vector<2x16xf32>
    %c5_119 = arith.constant 5 : index
    %c0_120 = arith.constant 0 : index
    %c16_121 = arith.constant 16 : index
    %180 = vector.load %arg6[%c5_119, %c0_120, %c16_121] : memref<8x2x32xf32, #tpu.memory_space<vmem>>, vector<1x2x16xf32>
    %181 = vector.shape_cast %180 : vector<1x2x16xf32> to vector<2x16xf32>
    %182 = tpu.concatenate %179, %181 in 1 : vector<2x16xf32>, vector<2x16xf32> -> vector<2x32xf32>
    %c2_122 = arith.constant 2 : index
    %c0_123 = arith.constant 0 : index
    %c0_124 = arith.constant 0 : index
    %183 = vector.load %arg4[%c2_122, %c0_123, %c0_124] : memref<8x2x32xf32, #tpu.memory_space<vmem>>, vector<1x2x32xf32>
    %184 = vector.shape_cast %183 : vector<1x2x32xf32> to vector<2x32xf32>
    %185 = vector.shape_cast %182 : vector<2x32xf32> to vector<1x2x32xf32>
    tpu.vector_store %arg4[%c2_122, %c0_123, %c0_124], %185 {strides = array<i32>} : memref<8x2x32xf32, #tpu.memory_space<vmem>>, vector<1x2x32xf32>,
    %c3_125 = arith.constant 3 : index
    %c0_126 = arith.constant 0 : index
    %c0_127 = arith.constant 0 : index
    %186 = vector.load %arg6[%c3_125, %c0_126, %c0_127] : memref<8x2x32xf32, #tpu.memory_space<vmem>>, vector<1x2x16xf32>
    %187 = vector.shape_cast %186 : vector<1x2x16xf32> to vector<2x16xf32>
    %c4_128 = arith.constant 4 : index
    %c0_129 = arith.constant 0 : index
    %c16_130 = arith.constant 16 : index
    %188 = vector.load %arg6[%c4_128, %c0_129, %c16_130] : memref<8x2x32xf32, #tpu.memory_space<vmem>>, vector<1x2x16xf32>
    %189 = vector.shape_cast %188 : vector<1x2x16xf32> to vector<2x16xf32>
    %190 = tpu.concatenate %187, %189 in 1 : vector<2x16xf32>, vector<2x16xf32> -> vector<2x32xf32>
    %c3_131 = arith.constant 3 : index
    %c0_132 = arith.constant 0 : index
    %c0_133 = arith.constant 0 : index
    %191 = vector.load %arg4[%c3_131, %c0_132, %c0_133] : memref<8x2x32xf32, #tpu.memory_space<vmem>>, vector<1x2x32xf32>
    %192 = vector.shape_cast %191 : vector<1x2x32xf32> to vector<2x32xf32>
    %193 = vector.shape_cast %190 : vector<2x32xf32> to vector<1x2x32xf32>
    tpu.vector_store %arg4[%c3_131, %c0_132, %c0_133], %193 {strides = array<i32>} : memref<8x2x32xf32, #tpu.memory_space<vmem>>, vector<1x2x32xf32>,
    %c4_134 = arith.constant 4 : index
    %c0_135 = arith.constant 0 : index
    %c0_136 = arith.constant 0 : index
    %194 = vector.load %arg6[%c4_134, %c0_135, %c0_136] : memref<8x2x32xf32, #tpu.memory_space<vmem>>, vector<1x2x16xf32>
    %195 = vector.shape_cast %194 : vector<1x2x16xf32> to vector<2x16xf32>
    %c3_137 = arith.constant 3 : index
    %c0_138 = arith.constant 0 : index
    %c16_139 = arith.constant 16 : index
    %196 = vector.load %arg6[%c3_137, %c0_138, %c16_139] : memref<8x2x32xf32, #tpu.memory_space<vmem>>, vector<1x2x16xf32>
    %197 = vector.shape_cast %196 : vector<1x2x16xf32> to vector<2x16xf32>
    %198 = tpu.concatenate %195, %197 in 1 : vector<2x16xf32>, vector<2x16xf32> -> vector<2x32xf32>
    %c4_140 = arith.constant 4 : index
    %c0_141 = arith.constant 0 : index
    %c0_142 = arith.constant 0 : index
    %199 = vector.load %arg4[%c4_140, %c0_141, %c0_142] : memref<8x2x32xf32, #tpu.memory_space<vmem>>, vector<1x2x32xf32>
    %200 = vector.shape_cast %199 : vector<1x2x32xf32> to vector<2x32xf32>
    %201 = vector.shape_cast %198 : vector<2x32xf32> to vector<1x2x32xf32>
    tpu.vector_store %arg4[%c4_140, %c0_141, %c0_142], %201 {strides = array<i32>} : memref<8x2x32xf32, #tpu.memory_space<vmem>>, vector<1x2x32xf32>,
    %c5_143 = arith.constant 5 : index
    %c0_144 = arith.constant 0 : index
    %c0_145 = arith.constant 0 : index
    %202 = vector.load %arg6[%c5_143, %c0_144, %c0_145] : memref<8x2x32xf32, #tpu.memory_space<vmem>>, vector<1x2x16xf32>
    %203 = vector.shape_cast %202 : vector<1x2x16xf32> to vector<2x16xf32>
    %c2_146 = arith.constant 2 : index
    %c0_147 = arith.constant 0 : index
    %c16_148 = arith.constant 16 : index
    %204 = vector.load %arg6[%c2_146, %c0_147, %c16_148] : memref<8x2x32xf32, #tpu.memory_space<vmem>>, vector<1x2x16xf32>
    %205 = vector.shape_cast %204 : vector<1x2x16xf32> to vector<2x16xf32>
    %206 = tpu.concatenate %203, %205 in 1 : vector<2x16xf32>, vector<2x16xf32> -> vector<2x32xf32>
    %c5_149 = arith.constant 5 : index
    %c0_150 = arith.constant 0 : index
    %c0_151 = arith.constant 0 : index
    %207 = vector.load %arg4[%c5_149, %c0_150, %c0_151] : memref<8x2x32xf32, #tpu.memory_space<vmem>>, vector<1x2x32xf32>
    %208 = vector.shape_cast %207 : vector<1x2x32xf32> to vector<2x32xf32>
    %209 = vector.shape_cast %206 : vector<2x32xf32> to vector<1x2x32xf32>
    tpu.vector_store %arg4[%c5_149, %c0_150, %c0_151], %209 {strides = array<i32>} : memref<8x2x32xf32, #tpu.memory_space<vmem>>, vector<1x2x32xf32>,
    %c6_152 = arith.constant 6 : index
    %c0_153 = arith.constant 0 : index
    %c0_154 = arith.constant 0 : index
    %210 = vector.load %arg6[%c6_152, %c0_153, %c0_154] : memref<8x2x32xf32, #tpu.memory_space<vmem>>, vector<1x2x16xf32>
    %211 = vector.shape_cast %210 : vector<1x2x16xf32> to vector<2x16xf32>
    %c1_155 = arith.constant 1 : index
    %c0_156 = arith.constant 0 : index
    %c16_157 = arith.constant 16 : index
    %212 = vector.load %arg6[%c1_155, %c0_156, %c16_157] : memref<8x2x32xf32, #tpu.memory_space<vmem>>, vector<1x2x16xf32>
    %213 = vector.shape_cast %212 : vector<1x2x16xf32> to vector<2x16xf32>
    %214 = tpu.concatenate %211, %213 in 1 : vector<2x16xf32>, vector<2x16xf32> -> vector<2x32xf32>
    %c6_158 = arith.constant 6 : index
    %c0_159 = arith.constant 0 : index
    %c0_160 = arith.constant 0 : index
    %215 = vector.load %arg4[%c6_158, %c0_159, %c0_160] : memref<8x2x32xf32, #tpu.memory_space<vmem>>, vector<1x2x32xf32>
    %216 = vector.shape_cast %215 : vector<1x2x32xf32> to vector<2x32xf32>
    %217 = vector.shape_cast %214 : vector<2x32xf32> to vector<1x2x32xf32>
    tpu.vector_store %arg4[%c6_158, %c0_159, %c0_160], %217 {strides = array<i32>} : memref<8x2x32xf32, #tpu.memory_space<vmem>>, vector<1x2x32xf32>,
    %c7_161 = arith.constant 7 : index
    %c0_162 = arith.constant 0 : index
    %c0_163 = arith.constant 0 : index
    %218 = vector.load %arg6[%c7_161, %c0_162, %c0_163] : memref<8x2x32xf32, #tpu.memory_space<vmem>>, vector<1x2x16xf32>
    %219 = vector.shape_cast %218 : vector<1x2x16xf32> to vector<2x16xf32>
    %c0_164 = arith.constant 0 : index
    %c0_165 = arith.constant 0 : index
    %c16_166 = arith.constant 16 : index
    %220 = vector.load %arg6[%c0_164, %c0_165, %c16_166] : memref<8x2x32xf32, #tpu.memory_space<vmem>>, vector<1x2x16xf32>
    %221 = vector.shape_cast %220 : vector<1x2x16xf32> to vector<2x16xf32>
    %222 = tpu.concatenate %219, %221 in 1 : vector<2x16xf32>, vector<2x16xf32> -> vector<2x32xf32>
    %c7_167 = arith.constant 7 : index
    %c0_168 = arith.constant 0 : index
    %c0_169 = arith.constant 0 : index
    %223 = vector.load %arg4[%c7_167, %c0_168, %c0_169] : memref<8x2x32xf32, #tpu.memory_space<vmem>>, vector<1x2x32xf32>
    %224 = vector.shape_cast %223 : vector<1x2x32xf32> to vector<2x32xf32>
    %225 = vector.shape_cast %222 : vector<2x32xf32> to vector<1x2x32xf32>
    tpu.vector_store %arg4[%c7_167, %c0_168, %c0_169], %225 {strides = array<i32>} : memref<8x2x32xf32, #tpu.memory_space<vmem>>, vector<1x2x32xf32>,
    return
  }
}

</mosaic_0001>

<llo_original>
// kernel: ner_forward.1
$region0: #{ner_forward.1}
  #allocation0 [shape = 'u32[]', space=smem, size = 0x4, offset = 0x4, fixed_abs, tag = 'smem constant byte address 0x4 - core index']
  #allocation1 [shape = 'u32[144,128]{1,0:T(1,128)}', space=vmem, size = 0x12000, scoped, tag = 'internal scratch']
  #allocation2 [shape = 'f32[8,2,32]{2,1,0:T(2,128)}', space=vmem, size = 0x2000, scoped, tag = 'scratch operand']
  #allocation3 [shape = 'f32[8,2,32]{2,1,0:T(2,128)}', space=vmem, size = 0x2000, scoped, tag = 'scratch operand']
  #allocation4 [shape = 'f32[2,32]{1,0:T(2,128)}', space=vmem, size = 0x400, scoped, tag = 'scratch operand']
  %s0 = inlined_call_operand.vmem [shape: f32[16,32], index: 0, kind: input, shape index: {}]
  %s1 = inlined_call_operand.vmem [shape: bf16[32,32], index: 1, kind: input, shape index: {}]
  %s2 = inlined_call_operand.vmem [shape: bf16[32,32], index: 2, kind: input, shape index: {}]
  %s3 = inlined_call_operand.vmem [shape: f32[1,32], index: 3, kind: input, shape index: {}]
  %s4 = inlined_call_operand.vmem [shape: f32[8,2,32], index: 4, kind: output, shape index: {}]
  %s5 = sld [smem:[#allocation0]]
  $region26: #{ner_forward.1} parent=0
    _
  %s7 = ssub.s32 1, %s5
  %s8 = scalar_select 0, %s7, %s5
  // Predicated region
  $region2: #{ner_forward.1} parent=0 // pred_check
    _
  $region3: #{ner_forward.1} parent=0 // pred_check_branch
    %10 = sbr.rel (0) target = $region5
  $region4: #{ner_forward.1} parent=0 // pred_region
    _
  $region5: #{ner_forward.1} parent=0 // pred_fallthru
    _
  // Predicated region
  $region6: #{ner_forward.1} parent=0 // pred_check
    _
  $region7: #{ner_forward.1} parent=0 // pred_check_branch
    %12 = sbr.rel (0) target = $region9
  $region8: #{ner_forward.1} parent=0 // pred_region
    _
  $region9: #{ner_forward.1} parent=0 // pred_fallthru
    _
  // Predicated region
  $region10: #{ner_forward.1} parent=0 // pred_check
    _
  $region11: #{ner_forward.1} parent=0 // pred_check_branch
    %14 = sbr.rel (0) target = $region13
  $region12: #{ner_forward.1} parent=0 // pred_region
    _
  $region13: #{ner_forward.1} parent=0 // pred_fallthru
    _
  // Predicated region
  $region14: #{ner_forward.1} parent=0 // pred_check
    _
  $region15: #{ner_forward.1} parent=0 // pred_check_branch
    %16 = sbr.rel (0) target = $region17
  $region16: #{ner_forward.1} parent=0 // pred_region
    _
  $region17: #{ner_forward.1} parent=0 // pred_fallthru
    _
  %v18 = vld [vmem:[%s0] sm:$0xff]
  %v19 = vld [vmem:[%s0 + $0x8] sm:$0xff]
  %v20 = vpack.c.bf16 %v19, %v18
  %v21 = vld [vmem:[%s1] sm:$0xf]
  %v22 = vld [vmem:[%s1 + $0x4] sm:$0xf]
  %v23 = vld [vmem:[%s1 + $0x8] sm:$0xf]
  %v24 = vld [vmem:[%s1 + $0xc] sm:$0xf]
  %v25 = vld [vmem:[%s3] sm:$0x1]
  %v27 = vlaneseq
  %v28 = vshrl.u32 %v27, 7
  %v29 = vsub.s32 0, %v28
  %v30 = vrot.slane %v25, %v29
  %v36 = vunpack.c.l.b16 %v21
  %v37 = vunpack.c.l.b16 %v22
  %v38 = vunpack.c.l.b16 %v23
  %v39 = vunpack.c.l.b16 %v24
  %v40 = vpack.c.b16 %v37, %v36
  %v41 = vpack.c.b16 %v39, %v38
  %vm44 = vcmask 261120
  %v46 = vsel %vm44, %v20, 0
  %48 = vmatprep.subr.bf16.mxu0 0
  %49 = vmatpush1.bf16.msra.mxu0 0
  %50 = vmatprep.subr.bf16.mxu0 0
  %51 = vmatpush1.bf16.msra.mxu0 0
  %52 = vmatprep.subr.bf16.mxu0 0
  %53 = vmatpush1.bf16.msra.mxu0 0
  %54 = vmatprep.subr.bf16.mxu0 0
  %55 = vmatpush1.bf16.msra.mxu0 0
  %56 = vmatprep.subr.bf16.mxu0 0
  %57 = vmatpush1.bf16.msra.mxu0 0
  %58 = vmatprep.subr.bf16.mxu0 0
  %59 = vmatpush1.bf16.msra.mxu0 0
  %60 = vmatprep.subr.bf16.mxu0 0
  %61 = vmatpush1.bf16.msra.mxu0 %v41
  %62 = vmatprep.subr.bf16.mxu0 0
  %63 = vmatpush1.bf16.msra.mxu0 %v40
  %64 = vmatprep.subr.bf16.mxu0 0
  %65 = vmatpush2.bf16.msra.mxu0 0
  %66 = vmatprep.subr.bf16.mxu0 0
  %67 = vmatpush2.bf16.msra.mxu0 0
  %68 = vmatprep.subr.bf16.mxu0 0
  %69 = vmatpush2.bf16.msra.mxu0 0
  %70 = vmatprep.subr.bf16.mxu0 0
  %71 = vmatpush2.bf16.msra.mxu0 0
  %72 = vmatprep.subr.bf16.mxu0 0
  %73 = vmatpush2.bf16.msra.mxu0 0
  %74 = vmatprep.subr.bf16.mxu0 0
  %75 = vmatpush2.bf16.msra.mxu0 0
  %76 = vmatprep.subr.bf16.mxu0 0
  %77 = vmatpush2.bf16.msra.mxu0 0
  %78 = vmatprep.subr.bf16.mxu0 0
  %79 = vmatpush2.bf16.msra.mxu0 0
  %80 = vmatprep.mubr.bf16.mxu0 0
  %81 = vmatmul.mubr.bf16.gmra.mxu0 %v46
  %v82 = vpop.f32.mrf.mxu0
  %v83 = vadd.f32 %v30, %v82
  %v84 = vpop.f32.mrf.mxu0
  %v85 = vpop.f32.mrf.mxu0
  %v86 = vadd.f32 %v30, %v85
  %v87 = vpop.f32.mrf.mxu0
  %88 = vdwg.mxu0
  %v90 = vrot.slane %v86, 6
  %vm92 = vcmask 130048
  %v93 = vsel %vm92, %v83, %v90
  %vm94 = vcmask 254976
  %95 = vst.msk [vmem:[#allocation2] sm:$0x3] %vm94, %v93
  %v96 = vrot.slane %v86, 2
  %v98 = vsel %vm92, %v83, %v96
  %s99 = scalar_lea.vmem [#allocation2], 2
  %vm100 = vcmask 257026
  %101 = vst.msk [vmem:[%s99 - $0x2] sm:$0xc] %vm100, %v98
  %s102 = scalar_lea.vmem [#allocation2], 4
  %vm103 = vcmask 259076
  %104 = vst.msk [vmem:[%s102 - $0x4] sm:$0x30] %vm103, %v93
  %s105 = scalar_lea.vmem [#allocation2], 6
  %vm106 = vcmask 261126
  %107 = vst.msk [vmem:[%s105 - $0x6] sm:$0xc0] %vm106, %v98
  %v109 = vrot.slane %v83, 6
  %v111 = vsel %vm92, %v86, %v109
  %s112 = scalar_lea.vmem [#allocation2], 8
  %113 = vst.msk [vmem:[%s112] sm:$0x3] %vm94, %v111
  %v114 = vrot.slane %v83, 2
  %v116 = vsel %vm92, %v86, %v114
  %s117 = scalar_lea.vmem [#allocation2], 10
  %118 = vst.msk [vmem:[%s117 - $0x2] sm:$0xc] %vm100, %v116
  %s119 = scalar_lea.vmem [#allocation2], 12
  %120 = vst.msk [vmem:[%s119 - $0x4] sm:$0x30] %vm103, %v111
  %s121 = scalar_lea.vmem [#allocation2], 14
  %122 = vst.msk [vmem:[%s121 - $0x6] sm:$0xc0] %vm106, %v116
  %123 = vst.msk [vmem:[#allocation4] sm:$0x3] %vm94, 0.0
  %v124 = vld [vmem:[%s2] sm:$0xf]
  %v125 = vld [vmem:[%s2 + $0x4] sm:$0xf]
  %v126 = vld [vmem:[%s2 + $0x8] sm:$0xf]
  %v127 = vld [vmem:[%s2 + $0xc] sm:$0xf]
  %v128 = vld [vmem:[#allocation4] sm:$0x3]
  %v129 = vpack.c.bf16 %v128, %v128
  %v130 = vld [vmem:[#allocation2] sm:$0x3]
  %v135 = vunpack.c.l.b16 %v124
  %v136 = vunpack.c.l.b16 %v125
  %v137 = vunpack.c.l.b16 %v126
  %v138 = vunpack.c.l.b16 %v127
  %v139 = vpack.c.b16 %v136, %v135
  %v140 = vpack.c.b16 %v138, %v137
  %v144 = vsel %vm44, %v129, 0
  %146 = vmatprep.subr.bf16.mxu0 0
  %147 = vmatpush1.bf16.msra.mxu0 0
  %148 = vmatprep.subr.bf16.mxu0 0
  %149 = vmatpush1.bf16.msra.mxu0 0
  %150 = vmatprep.subr.bf16.mxu0 0
  %151 = vmatpush1.bf16.msra.mxu0 0
  %152 = vmatprep.subr.bf16.mxu0 0
  %153 = vmatpush1.bf16.msra.mxu0 0
  %154 = vmatprep.subr.bf16.mxu0 0
  %155 = vmatpush1.bf16.msra.mxu0 0
  %156 = vmatprep.subr.bf16.mxu0 0
  %157 = vmatpush1.bf16.msra.mxu0 0
  %158 = vmatprep.subr.bf16.mxu0 0
  %159 = vmatpush1.bf16.msra.mxu0 %v140
  %160 = vmatprep.subr.bf16.mxu0 0
  %161 = vmatpush1.bf16.msra.mxu0 %v139
  %162 = vmatprep.subr.bf16.mxu0 0
  %163 = vmatpush2.bf16.msra.mxu0 0
  %164 = vmatprep.subr.bf16.mxu0 0
  %165 = vmatpush2.bf16.msra.mxu0 0
  %166 = vmatprep.subr.bf16.mxu0 0
  %167 = vmatpush2.bf16.msra.mxu0 0
  %168 = vmatprep.subr.bf16.mxu0 0
  %169 = vmatpush2.bf16.msra.mxu0 0
  %170 = vmatprep.subr.bf16.mxu0 0
  %171 = vmatpush2.bf16.msra.mxu0 0
  %172 = vmatprep.subr.bf16.mxu0 0
  %173 = vmatpush2.bf16.msra.mxu0 0
  %174 = vmatprep.subr.bf16.mxu0 0
  %175 = vmatpush2.bf16.msra.mxu0 0
  %176 = vmatprep.subr.bf16.mxu0 0
  %177 = vmatpush2.bf16.msra.mxu0 0
  %178 = vmatprep.mubr.bf16.mxu0 0
  %179 = vmatmul.mubr.bf16.gmra.mxu0 %v144
  %v180 = vpop.f32.mrf.mxu0
  %v181 = vadd.f32 %v130, %v180
  %v182 = vpop.f32.mrf.mxu0
  %v183 = vpop.f32.mrf.mxu0
  %v184 = vpop.f32.mrf.mxu0
  %185 = vdwg.mxu0
  %v186 = vtanh.pop %v181
  %187 = vst.msk [vmem:[#allocation4] sm:$0x3] %vm94, %v186
  %188 = vst.msk [vmem:[#allocation3] sm:$0x3] %vm94, %v186
  %v189 = vld [vmem:[#allocation4] sm:$0x3]
  %v190 = vpack.c.bf16 %v189, %v189
  %v191 = vld [vmem:[%s99] sm:$0x3]
  %v193 = vsel %vm44, %v190, 0
  %195 = vmatprep.subr.bf16.mxu0 0
  %196 = vmatpush1.bf16.msra.mxu0 0
  %197 = vmatprep.subr.bf16.mxu0 0
  %198 = vmatpush1.bf16.msra.mxu0 0
  %199 = vmatprep.subr.bf16.mxu0 0
  %200 = vmatpush1.bf16.msra.mxu0 0
  %201 = vmatprep.subr.bf16.mxu0 0
  %202 = vmatpush1.bf16.msra.mxu0 0
  %203 = vmatprep.subr.bf16.mxu0 0
  %204 = vmatpush1.bf16.msra.mxu0 0
  %205 = vmatprep.subr.bf16.mxu0 0
  %206 = vmatpush1.bf16.msra.mxu0 0
  %207 = vmatprep.subr.bf16.mxu0 0
  %208 = vmatpush1.bf16.msra.mxu0 %v140
  %209 = vmatprep.subr.bf16.mxu0 0
  %210 = vmatpush1.bf16.msra.mxu0 %v139
  %211 = vmatprep.subr.bf16.mxu0 0
  %212 = vmatpush2.bf16.msra.mxu0 0
  %213 = vmatprep.subr.bf16.mxu0 0
  %214 = vmatpush2.bf16.msra.mxu0 0
  %215 = vmatprep.subr.bf16.mxu0 0
  %216 = vmatpush2.bf16.msra.mxu0 0
  %217 = vmatprep.subr.bf16.mxu0 0
  %218 = vmatpush2.bf16.msra.mxu0 0
  %219 = vmatprep.subr.bf16.mxu0 0
  %220 = vmatpush2.bf16.msra.mxu0 0
  %221 = vmatprep.subr.bf16.mxu0 0
  %222 = vmatpush2.bf16.msra.mxu0 0
  %223 = vmatprep.subr.bf16.mxu0 0
  %224 = vmatpush2.bf16.msra.mxu0 0
  %225 = vmatprep.subr.bf16.mxu0 0
  %226 = vmatpush2.bf16.msra.mxu0 0
  %227 = vmatprep.mubr.bf16.mxu0 0
  %228 = vmatmul.mubr.bf16.gmra.mxu0 %v193
  %v229 = vpop.f32.mrf.mxu0
  %v230 = vadd.f32 %v191, %v229
  %v231 = vpop.f32.mrf.mxu0
  %v232 = vpop.f32.mrf.mxu0
  %v233 = vpop.f32.mrf.mxu0
  %234 = vdwg.mxu0
  %v235 = vtanh.pop %v230
  %236 = vst.msk [vmem:[#allocation4] sm:$0x3] %vm94, %v235
  %s237 = scalar_lea.vmem [#allocation3], 2
  %238 = vst.msk [vmem:[%s237] sm:$0x3] %vm94, %v235
  %v239 = vld [vmem:[#allocation4] sm:$0x3]
  %v240 = vpack.c.bf16 %v239, %v239
  %v241 = vld [vmem:[%s102] sm:$0x3]
  %v243 = vsel %vm44, %v240, 0
  %245 = vmatprep.subr.bf16.mxu0 0
  %246 = vmatpush1.bf16.msra.mxu0 0
  %247 = vmatprep.subr.bf16.mxu0 0
  %248 = vmatpush1.bf16.msra.mxu0 0
  %249 = vmatprep.subr.bf16.mxu0 0
  %250 = vmatpush1.bf16.msra.mxu0 0
  %251 = vmatprep.subr.bf16.mxu0 0
  %252 = vmatpush1.bf16.msra.mxu0 0
  %253 = vmatprep.subr.bf16.mxu0 0
  %254 = vmatpush1.bf16.msra.mxu0 0
  %255 = vmatprep.subr.bf16.mxu0 0
  %256 = vmatpush1.bf16.msra.mxu0 0
  %257 = vmatprep.subr.bf16.mxu0 0
  %258 = vmatpush1.bf16.msra.mxu0 %v140
  %259 = vmatprep.subr.bf16.mxu0 0
  %260 = vmatpush1.bf16.msra.mxu0 %v139
  %261 = vmatprep.subr.bf16.mxu0 0
  %262 = vmatpush2.bf16.msra.mxu0 0
  %263 = vmatprep.subr.bf16.mxu0 0
  %264 = vmatpush2.bf16.msra.mxu0 0
  %265 = vmatprep.subr.bf16.mxu0 0
  %266 = vmatpush2.bf16.msra.mxu0 0
  %267 = vmatprep.subr.bf16.mxu0 0
  %268 = vmatpush2.bf16.msra.mxu0 0
  %269 = vmatprep.subr.bf16.mxu0 0
  %270 = vmatpush2.bf16.msra.mxu0 0
  %271 = vmatprep.subr.bf16.mxu0 0
  %272 = vmatpush2.bf16.msra.mxu0 0
  %273 = vmatprep.subr.bf16.mxu0 0
  %274 = vmatpush2.bf16.msra.mxu0 0
  %275 = vmatprep.subr.bf16.mxu0 0
  %276 = vmatpush2.bf16.msra.mxu0 0
  %277 = vmatprep.mubr.bf16.mxu0 0
  %278 = vmatmul.mubr.bf16.gmra.mxu0 %v243
  %v279 = vpop.f32.mrf.mxu0
  %v280 = vadd.f32 %v241, %v279
  %v281 = vpop.f32.mrf.mxu0
  %v282 = vpop.f32.mrf.mxu0
  %v283 = vpop.f32.mrf.mxu0
  %284 = vdwg.mxu0
  %v285 = vtanh.pop %v280
  %286 = vst.msk [vmem:[#allocation4] sm:$0x3] %vm94, %v285
  %s287 = scalar_lea.vmem [#allocation3], 4
  %288 = vst.msk [vmem:[%s287] sm:$0x3] %vm94, %v285
  %v289 = vld [vmem:[#allocation4] sm:$0x3]
  %v290 = vpack.c.bf16 %v289, %v289
  %v291 = vld [vmem:[%s105] sm:$0x3]
  %v293 = vsel %vm44, %v290, 0
  %295 = vmatprep.subr.bf16.mxu0 0
  %296 = vmatpush1.bf16.msra.mxu0 0
  %297 = vmatprep.subr.bf16.mxu0 0
  %298 = vmatpush1.bf16.msra.mxu0 0
  %299 = vmatprep.subr.bf16.mxu0 0
  %300 = vmatpush1.bf16.msra.mxu0 0
  %301 = vmatprep.subr.bf16.mxu0 0
  %302 = vmatpush1.bf16.msra.mxu0 0
  %303 = vmatprep.subr.bf16.mxu0 0
  %304 = vmatpush1.bf16.msra.mxu0 0
  %305 = vmatprep.subr.bf16.mxu0 0
  %306 = vmatpush1.bf16.msra.mxu0 0
  %307 = vmatprep.subr.bf16.mxu0 0
  %308 = vmatpush1.bf16.msra.mxu0 %v140
  %309 = vmatprep.subr.bf16.mxu0 0
  %310 = vmatpush1.bf16.msra.mxu0 %v139
  %311 = vmatprep.subr.bf16.mxu0 0
  %312 = vmatpush2.bf16.msra.mxu0 0
  %313 = vmatprep.subr.bf16.mxu0 0
  %314 = vmatpush2.bf16.msra.mxu0 0
  %315 = vmatprep.subr.bf16.mxu0 0
  %316 = vmatpush2.bf16.msra.mxu0 0
  %317 = vmatprep.subr.bf16.mxu0 0
  %318 = vmatpush2.bf16.msra.mxu0 0
  %319 = vmatprep.subr.bf16.mxu0 0
  %320 = vmatpush2.bf16.msra.mxu0 0
  %321 = vmatprep.subr.bf16.mxu0 0
  %322 = vmatpush2.bf16.msra.mxu0 0
  %323 = vmatprep.subr.bf16.mxu0 0
  %324 = vmatpush2.bf16.msra.mxu0 0
  %325 = vmatprep.subr.bf16.mxu0 0
  %326 = vmatpush2.bf16.msra.mxu0 0
  %327 = vmatprep.mubr.bf16.mxu0 0
  %328 = vmatmul.mubr.bf16.gmra.mxu0 %v293
  %v329 = vpop.f32.mrf.mxu0
  %v330 = vadd.f32 %v291, %v329
  %v331 = vpop.f32.mrf.mxu0
  %v332 = vpop.f32.mrf.mxu0
  %v333 = vpop.f32.mrf.mxu0
  %334 = vdwg.mxu0
  %v335 = vtanh.pop %v330
  %336 = vst.msk [vmem:[#allocation4] sm:$0x3] %vm94, %v335
  %s337 = scalar_lea.vmem [#allocation3], 6
  %338 = vst.msk [vmem:[%s337] sm:$0x3] %vm94, %v335
  %v339 = vld [vmem:[#allocation4] sm:$0x3]
  %v340 = vpack.c.bf16 %v339, %v339
  %v341 = vld [vmem:[%s112] sm:$0x3]
  %v343 = vsel %vm44, %v340, 0
  %345 = vmatprep.subr.bf16.mxu0 0
  %346 = vmatpush1.bf16.msra.mxu0 0
  %347 = vmatprep.subr.bf16.mxu0 0
  %348 = vmatpush1.bf16.msra.mxu0 0
  %349 = vmatprep.subr.bf16.mxu0 0
  %350 = vmatpush1.bf16.msra.mxu0 0
  %351 = vmatprep.subr.bf16.mxu0 0
  %352 = vmatpush1.bf16.msra.mxu0 0
  %353 = vmatprep.subr.bf16.mxu0 0
  %354 = vmatpush1.bf16.msra.mxu0 0
  %355 = vmatprep.subr.bf16.mxu0 0
  %356 = vmatpush1.bf16.msra.mxu0 0
  %357 = vmatprep.subr.bf16.mxu0 0
  %358 = vmatpush1.bf16.msra.mxu0 %v140
  %359 = vmatprep.subr.bf16.mxu0 0
  %360 = vmatpush1.bf16.msra.mxu0 %v139
  %361 = vmatprep.subr.bf16.mxu0 0
  %362 = vmatpush2.bf16.msra.mxu0 0
  %363 = vmatprep.subr.bf16.mxu0 0
  %364 = vmatpush2.bf16.msra.mxu0 0
  %365 = vmatprep.subr.bf16.mxu0 0
  %366 = vmatpush2.bf16.msra.mxu0 0
  %367 = vmatprep.subr.bf16.mxu0 0
  %368 = vmatpush2.bf16.msra.mxu0 0
  %369 = vmatprep.subr.bf16.mxu0 0
  %370 = vmatpush2.bf16.msra.mxu0 0
  %371 = vmatprep.subr.bf16.mxu0 0
  %372 = vmatpush2.bf16.msra.mxu0 0
  %373 = vmatprep.subr.bf16.mxu0 0
  %374 = vmatpush2.bf16.msra.mxu0 0
  %375 = vmatprep.subr.bf16.mxu0 0
  %376 = vmatpush2.bf16.msra.mxu0 0
  %377 = vmatprep.mubr.bf16.mxu0 0
  %378 = vmatmul.mubr.bf16.gmra.mxu0 %v343
  %v379 = vpop.f32.mrf.mxu0
  %v380 = vadd.f32 %v341, %v379
  %v381 = vpop.f32.mrf.mxu0
  %v382 = vpop.f32.mrf.mxu0
  %v383 = vpop.f32.mrf.mxu0
  %384 = vdwg.mxu0
  %v385 = vtanh.pop %v380
  %386 = vst.msk [vmem:[#allocation4] sm:$0x3] %vm94, %v385
  %s387 = scalar_lea.vmem [#allocation3], 8
  %388 = vst.msk [vmem:[%s387] sm:$0x3] %vm94, %v385
  %v389 = vld [vmem:[#allocation4] sm:$0x3]
  %v390 = vpack.c.bf16 %v389, %v389
  %v391 = vld [vmem:[%s117] sm:$0x3]
  %v393 = vsel %vm44, %v390, 0
  %395 = vmatprep.subr.bf16.mxu0 0
  %396 = vmatpush1.bf16.msra.mxu0 0
  %397 = vmatprep.subr.bf16.mxu0 0
  %398 = vmatpush1.bf16.msra.mxu0 0
  %399 = vmatprep.subr.bf16.mxu0 0
  %400 = vmatpush1.bf16.msra.mxu0 0
  %401 = vmatprep.subr.bf16.mxu0 0
  %402 = vmatpush1.bf16.msra.mxu0 0
  %403 = vmatprep.subr.bf16.mxu0 0
  %404 = vmatpush1.bf16.msra.mxu0 0
  %405 = vmatprep.subr.bf16.mxu0 0
  %406 = vmatpush1.bf16.msra.mxu0 0
  %407 = vmatprep.subr.bf16.mxu0 0
  %408 = vmatpush1.bf16.msra.mxu0 %v140
  %409 = vmatprep.subr.bf16.mxu0 0
  %410 = vmatpush1.bf16.msra.mxu0 %v139
  %411 = vmatprep.subr.bf16.mxu0 0
  %412 = vmatpush2.bf16.msra.mxu0 0
  %413 = vmatprep.subr.bf16.mxu0 0
  %414 = vmatpush2.bf16.msra.mxu0 0
  %415 = vmatprep.subr.bf16.mxu0 0
  %416 = vmatpush2.bf16.msra.mxu0 0
  %417 = vmatprep.subr.bf16.mxu0 0
  %418 = vmatpush2.bf16.msra.mxu0 0
  %419 = vmatprep.subr.bf16.mxu0 0
  %420 = vmatpush2.bf16.msra.mxu0 0
  %421 = vmatprep.subr.bf16.mxu0 0
  %422 = vmatpush2.bf16.msra.mxu0 0
  %423 = vmatprep.subr.bf16.mxu0 0
  %424 = vmatpush2.bf16.msra.mxu0 0
  %425 = vmatprep.subr.bf16.mxu0 0
  %426 = vmatpush2.bf16.msra.mxu0 0
  %427 = vmatprep.mubr.bf16.mxu0 0
  %428 = vmatmul.mubr.bf16.gmra.mxu0 %v393
  %v429 = vpop.f32.mrf.mxu0
  %v430 = vadd.f32 %v391, %v429
  %v431 = vpop.f32.mrf.mxu0
  %v432 = vpop.f32.mrf.mxu0
  %v433 = vpop.f32.mrf.mxu0
  %434 = vdwg.mxu0
  %v435 = vtanh.pop %v430
  %436 = vst.msk [vmem:[#allocation4] sm:$0x3] %vm94, %v435
  %s437 = scalar_lea.vmem [#allocation3], 10
  %438 = vst.msk [vmem:[%s437] sm:$0x3] %vm94, %v435
  %v439 = vld [vmem:[#allocation4] sm:$0x3]
  %v440 = vpack.c.bf16 %v439, %v439
  %v441 = vld [vmem:[%s119] sm:$0x3]
  %v443 = vsel %vm44, %v440, 0
  %445 = vmatprep.subr.bf16.mxu0 0
  %446 = vmatpush1.bf16.msra.mxu0 0
  %447 = vmatprep.subr.bf16.mxu0 0
  %448 = vmatpush1.bf16.msra.mxu0 0
  %449 = vmatprep.subr.bf16.mxu0 0
  %450 = vmatpush1.bf16.msra.mxu0 0
  %451 = vmatprep.subr.bf16.mxu0 0
  %452 = vmatpush1.bf16.msra.mxu0 0
  %453 = vmatprep.subr.bf16.mxu0 0
  %454 = vmatpush1.bf16.msra.mxu0 0
  %455 = vmatprep.subr.bf16.mxu0 0
  %456 = vmatpush1.bf16.msra.mxu0 0
  %457 = vmatprep.subr.bf16.mxu0 0
  %458 = vmatpush1.bf16.msra.mxu0 %v140
  %459 = vmatprep.subr.bf16.mxu0 0
  %460 = vmatpush1.bf16.msra.mxu0 %v139
  %461 = vmatprep.subr.bf16.mxu0 0
  %462 = vmatpush2.bf16.msra.mxu0 0
  %463 = vmatprep.subr.bf16.mxu0 0
  %464 = vmatpush2.bf16.msra.mxu0 0
  %465 = vmatprep.subr.bf16.mxu0 0
  %466 = vmatpush2.bf16.msra.mxu0 0
  %467 = vmatprep.subr.bf16.mxu0 0
  %468 = vmatpush2.bf16.msra.mxu0 0
  %469 = vmatprep.subr.bf16.mxu0 0
  %470 = vmatpush2.bf16.msra.mxu0 0
  %471 = vmatprep.subr.bf16.mxu0 0
  %472 = vmatpush2.bf16.msra.mxu0 0
  %473 = vmatprep.subr.bf16.mxu0 0
  %474 = vmatpush2.bf16.msra.mxu0 0
  %475 = vmatprep.subr.bf16.mxu0 0
  %476 = vmatpush2.bf16.msra.mxu0 0
  %477 = vmatprep.mubr.bf16.mxu0 0
  %478 = vmatmul.mubr.bf16.gmra.mxu0 %v443
  %v479 = vpop.f32.mrf.mxu0
  %v480 = vadd.f32 %v441, %v479
  %v481 = vpop.f32.mrf.mxu0
  %v482 = vpop.f32.mrf.mxu0
  %v483 = vpop.f32.mrf.mxu0
  %484 = vdwg.mxu0
  %v485 = vtanh.pop %v480
  %486 = vst.msk [vmem:[#allocation4] sm:$0x3] %vm94, %v485
  %s487 = scalar_lea.vmem [#allocation3], 12
  %488 = vst.msk [vmem:[%s487] sm:$0x3] %vm94, %v485
  %v489 = vld [vmem:[#allocation4] sm:$0x3]
  %v490 = vpack.c.bf16 %v489, %v489
  %v491 = vld [vmem:[%s121] sm:$0x3]
  %v493 = vsel %vm44, %v490, 0
  %495 = vmatprep.subr.bf16.mxu0 0
  %496 = vmatpush1.bf16.msra.mxu0 0
  %497 = vmatprep.subr.bf16.mxu0 0
  %498 = vmatpush1.bf16.msra.mxu0 0
  %499 = vmatprep.subr.bf16.mxu0 0
  %500 = vmatpush1.bf16.msra.mxu0 0
  %501 = vmatprep.subr.bf16.mxu0 0
  %502 = vmatpush1.bf16.msra.mxu0 0
  %503 = vmatprep.subr.bf16.mxu0 0
  %504 = vmatpush1.bf16.msra.mxu0 0
  %505 = vmatprep.subr.bf16.mxu0 0
  %506 = vmatpush1.bf16.msra.mxu0 0
  %507 = vmatprep.subr.bf16.mxu0 0
  %508 = vmatpush1.bf16.msra.mxu0 %v140
  %509 = vmatprep.subr.bf16.mxu0 0
  %510 = vmatpush1.bf16.msra.mxu0 %v139
  %511 = vmatprep.subr.bf16.mxu0 0
  %512 = vmatpush2.bf16.msra.mxu0 0
  %513 = vmatprep.subr.bf16.mxu0 0
  %514 = vmatpush2.bf16.msra.mxu0 0
  %515 = vmatprep.subr.bf16.mxu0 0
  %516 = vmatpush2.bf16.msra.mxu0 0
  %517 = vmatprep.subr.bf16.mxu0 0
  %518 = vmatpush2.bf16.msra.mxu0 0
  %519 = vmatprep.subr.bf16.mxu0 0
  %520 = vmatpush2.bf16.msra.mxu0 0
  %521 = vmatprep.subr.bf16.mxu0 0
  %522 = vmatpush2.bf16.msra.mxu0 0
  %523 = vmatprep.subr.bf16.mxu0 0
  %524 = vmatpush2.bf16.msra.mxu0 0
  %525 = vmatprep.subr.bf16.mxu0 0
  %526 = vmatpush2.bf16.msra.mxu0 0
  %527 = vmatprep.mubr.bf16.mxu0 0
  %528 = vmatmul.mubr.bf16.gmra.mxu0 %v493
  %v529 = vpop.f32.mrf.mxu0
  %v530 = vadd.f32 %v491, %v529
  %v531 = vpop.f32.mrf.mxu0
  %v532 = vpop.f32.mrf.mxu0
  %v533 = vpop.f32.mrf.mxu0
  %534 = vdwg.mxu0
  %v535 = vtanh.pop %v530
  %536 = vst.msk [vmem:[#allocation4] sm:$0x3] %vm94, %v535
  %s537 = scalar_lea.vmem [#allocation3], 14
  %538 = vst.msk [vmem:[%s537] sm:$0x3] %vm94, %v535
  %v539 = vld [vmem:[#allocation3] sm:$0x3]
  %v540 = vld [vmem:[%s537] sm:$0x3]
  %v541 = vsel %vm92, %v539, %v540
  %542 = vst.msk [vmem:[%s4] sm:$0x3] %vm94, %v541
  %v543 = vld [vmem:[%s237] sm:$0x3]
  %v544 = vld [vmem:[%s487] sm:$0x3]
  %v545 = vsel %vm92, %v543, %v544
  %s546 = scalar_lea.vmem %s4, 2
  %547 = vst.msk [vmem:[%s546] sm:$0x3] %vm94, %v545
  %v548 = vld [vmem:[%s287] sm:$0x3]
  %v549 = vld [vmem:[%s437] sm:$0x3]
  %v550 = vsel %vm92, %v548, %v549
  %s551 = scalar_lea.vmem %s4, 4
  %552 = vst.msk [vmem:[%s551] sm:$0x3] %vm94, %v550
  %v553 = vld [vmem:[%s337] sm:$0x3]
  %v554 = vld [vmem:[%s387] sm:$0x3]
  %v555 = vsel %vm92, %v553, %v554
  %s556 = scalar_lea.vmem %s4, 6
  %557 = vst.msk [vmem:[%s556] sm:$0x3] %vm94, %v555
  %v558 = vld [vmem:[%s387] sm:$0x3]
  %v559 = vld [vmem:[%s337] sm:$0x3]
  %v560 = vsel %vm92, %v558, %v559
  %s561 = scalar_lea.vmem %s4, 8
  %562 = vst.msk [vmem:[%s561] sm:$0x3] %vm94, %v560
  %v563 = vld [vmem:[%s437] sm:$0x3]
  %v564 = vld [vmem:[%s287] sm:$0x3]
  %v565 = vsel %vm92, %v563, %v564
  %s566 = scalar_lea.vmem %s4, 10
  %567 = vst.msk [vmem:[%s566] sm:$0x3] %vm94, %v565
  %v568 = vld [vmem:[%s487] sm:$0x3]
  %v569 = vld [vmem:[%s237] sm:$0x3]
  %v570 = vsel %vm92, %v568, %v569
  %s571 = scalar_lea.vmem %s4, 12
  %572 = vst.msk [vmem:[%s571] sm:$0x3] %vm94, %v570
  %v573 = vld [vmem:[%s537] sm:$0x3]
  %v574 = vld [vmem:[#allocation3] sm:$0x3]
  %v575 = vsel %vm92, %v573, %v574
  %s576 = scalar_lea.vmem %s4, 14
  %577 = vst.msk [vmem:[%s576] sm:$0x3] %vm94, %v575
  // Predicated region
  $region18: #{ner_forward.1} parent=0 // pred_check
    _
  $region19: #{ner_forward.1} parent=0 // pred_check_branch
    %579 = sbr.rel (0) target = $region21
  $region20: #{ner_forward.1} parent=0 // pred_region
    _
  $region21: #{ner_forward.1} parent=0 // pred_fallthru
    _
  // Predicated region
  $region22: #{ner_forward.1} parent=0 // pred_check
    _
  $region23: #{ner_forward.1} parent=0 // pred_check_branch
    %581 = sbr.rel (0) target = $region25
  $region24: #{ner_forward.1} parent=0 // pred_region
    _
  $region25: #{ner_forward.1} parent=0 // pred_fallthru
    _

</llo_original>
